<compile_context>
chip_gen: v7x
topology: tpu7x:2x2x1
jax: 0.10.0
libtpu: 0.0.40
codegen_flags: <defaults>
</compile_context>

<pallas_src>
import jax
import jax.numpy as jnp
from jax.experimental import pallas as pl
from jax.experimental.pallas import tpu as pltpu


def _round_up(x: int, m: int) -> int:
    return pl.cdiv(x, m) * m


def _sublane(dtype) -> int:
    # sublane packing: f32 -> 8, bf16 -> 16, int8/fp8 -> 32
    return max(8, 32 // jnp.dtype(dtype).itemsize)


def _make_kernel(add_bias: bool, with_lora: bool, scale: float):
    """refs = [x, Wt, (xa, Bt)?, (bias)?, out, acc_scratch]."""

    def kernel(*refs):
        idx = 0
        x_ref = refs[idx]; idx += 1
        wt_ref = refs[idx]; idx += 1
        if with_lora:
            xa_ref = refs[idx]; idx += 1
            bt_ref = refs[idx]; idx += 1
        if add_bias:
            bias_ref = refs[idx]; idx += 1
        o_ref = refs[idx]; idx += 1
        acc_ref = refs[idx]

        k = pl.program_id(2)

        @pl.when(k == 0)
        def _():
            acc_ref[...] = jnp.zeros_like(acc_ref)

        # Base matmul: x (tm, tk) . W^T tile (tk, tn) — NN layout, MXU-native,
        # f32 accumulation regardless of compute dtype.
        acc_ref[...] += jnp.dot(x_ref[...], wt_ref[...],
                                preferred_element_type=jnp.float32)

        @pl.when(k == pl.num_programs(2) - 1)
        def _():
            out = acc_ref[...]
            if with_lora:
                # LoRA epilogue: (tm, r) . (r, tn), once per output tile.
                delta = jnp.dot(xa_ref[...], bt_ref[...],
                                preferred_element_type=jnp.float32)
                if scale != 1.0:
                    delta = delta * scale       # alpha/rank applied in f32
                out = out + delta
            if add_bias:
                out = out + bias_ref[...]       # f32 (1, tn) broadcasts over rows
            o_ref[...] = out.astype(o_ref.dtype)

    return kernel


def prepare_params(weight, bias=None, lora_A=None, lora_B=None, *,
                   lora_rank=None, lora_alpha=None,
                   compute_dtype=jnp.bfloat16, tn=512, tk=1024):
    """One-time (cache outside the hot path) weight preparation.

    weight: (N, K) nn.Linear layout; bias: (N,) or None
    lora_A: (r, K) or None; lora_B: (N, r) or None
    """
    N, K = weight.shape
    cdt = jnp.dtype(compute_dtype)

    tn_e = min(_round_up(tn, 128), _round_up(N, 128))
    tk_e = min(_round_up(tk, 128), _round_up(K, 128))
    Np, Kp = _round_up(N, tn_e), _round_up(K, tk_e)

    # Pre-transpose once: (K, N) so the kernel does a straight NN matmul.
    wt = weight.astype(cdt).T
    if (Kp, Np) != (K, N):
        wt = jnp.pad(wt, ((0, Kp - K), (0, Np - N)))

    params = dict(wt=wt, bias=bias, N=N, K=K, Np=Np, Kp=Kp,
                  tn_e=tn_e, tk_e=tk_e, cdt=cdt)

    if bias is not None:
        b2 = bias.astype(jnp.float32).reshape(1, N)      # keep bias in f32
        if Np != N:
            b2 = jnp.pad(b2, ((0, 0), (0, Np - N)))
        params["bias2d"] = b2
    else:
        params["bias2d"] = None

    if (lora_A is not None) and (lora_B is not None):
        r = lora_A.shape[0]
        scale = 1.0
        if (lora_rank is not None and lora_alpha is not None
                and lora_alpha != lora_rank):
            scale = float(lora_alpha) / float(lora_rank)
        a_t = lora_A.astype(cdt).T                       # (K, r) for x @ A^T
        bt = lora_B.astype(cdt).T                        # (r, N) NN layout
        if Np != N:
            bt = jnp.pad(bt, ((0, 0), (0, Np - N)))
        params.update(a_t=a_t, bt=bt, r=r, scale=scale)
    else:
        params.update(a_t=None, bt=None, r=0, scale=1.0)
    return params


def row_parallel_lora_forward(x, params, *, skip_bias_add=False, tm=512):
    """Hot-path forward. x: (M, K). Returns (output, output_bias)."""
    M, K = x.shape
    assert K == params["K"], "x last dim must equal in_features"
    cdt = params["cdt"]
    N, Np, Kp = params["N"], params["Np"], params["Kp"]
    tn_e, tk_e = params["tn_e"], params["tk_e"]
    r = params["r"]
    with_lora = params["a_t"] is not None
    add_bias = (params["bias"] is not None) and (not skip_bias_add)
    out_dtype = x.dtype

    sub = _sublane(cdt)
    tm_e = min(_round_up(tm, sub), _round_up(M, sub))
    Mp = _round_up(M, tm_e)

    xp = x.astype(cdt) if x.dtype != cdt else x

    xa = None
    if with_lora:
        # xa = x @ A^T computed once (tiny (M, r) output); the LoRA-B matmul is
        # applied only in the kernel's last-k epilogue.
        xa = jnp.dot(xp, params["a_t"],
                     preferred_element_type=jnp.float32).astype(cdt)
        if Mp != M:
            xa = jnp.pad(xa, ((0, Mp - M), (0, 0)))

    if (Mp, Kp) != (M, K):
        xp = jnp.pad(xp, ((0, Mp - M), (0, Kp - K)))

    in_specs = [
        pl.BlockSpec((tm_e, tk_e), lambda i, j, k: (i, k)),   # x   (Mp, Kp)
        pl.BlockSpec((tk_e, tn_e), lambda i, j, k: (k, j)),   # W^T (Kp, Np)
    ]
    args = [xp, params["wt"]]
    if with_lora:
        in_specs += [
            pl.BlockSpec((tm_e, r), lambda i, j, k: (i, 0)),  # xa  (Mp, r)
            pl.BlockSpec((r, tn_e), lambda i, j, k: (0, j)),  # B^T (r, Np)
        ]
        args += [xa, params["bt"]]
    if add_bias:
        in_specs.append(pl.BlockSpec((1, tn_e), lambda i, j, k: (0, j)))
        args.append(params["bias2d"])

    grid = (Mp // tm_e, Np // tn_e, Kp // tk_e)
    gi, gj, gk = grid
    itemsize = cdt.itemsize
    out_itemsize = jnp.dtype(out_dtype).itemsize

    # Cost estimate matches what the kernel executes (LoRA-B once per output
    # tile) and includes K-loop re-reads of x / W.
    flops = 2 * Mp * Np * Kp + (2 * Mp * Np * r if with_lora else 0)
    bytes_accessed = (Mp * Kp * itemsize * gj          # x re-read per N tile
                      + Kp * Np * itemsize * gi        # W re-read per M tile
                      + Mp * Np * out_itemsize)
    if with_lora:
        bytes_accessed += Mp * r * itemsize + gi * Np * r * itemsize
    if add_bias:
        bytes_accessed += gi * Np * 4

    # Double-buffered tile footprint -> explicit scoped-VMEM limit.
    footprint = 2 * (tm_e * tk_e + tk_e * tn_e) * itemsize     # x, W
    footprint += 2 * tm_e * tn_e * out_itemsize                # out
    footprint += tm_e * tn_e * 4                               # f32 acc scratch
    if with_lora:
        footprint += 2 * (tm_e * r + r * tn_e) * itemsize
    if add_bias:
        footprint += 2 * tn_e * 4
    vmem_limit = min(64 << 20, max(int(footprint * 1.5) + (1 << 20), 32 << 20))

    out_padded = pl.pallas_call(
        _make_kernel(add_bias, with_lora, params["scale"]),
        out_shape=jax.ShapeDtypeStruct((Mp, Np), out_dtype),
        grid_spec=pltpu.PrefetchScalarGridSpec(
            num_scalar_prefetch=0,
            grid=grid,
            in_specs=in_specs,
            out_specs=pl.BlockSpec((tm_e, tn_e), lambda i, j, k: (i, j)),
            scratch_shapes=[pltpu.VMEM((tm_e, tn_e), jnp.float32)],
        ),
        compiler_params=pltpu.CompilerParams(
            dimension_semantics=("parallel", "parallel", "arbitrary"),
            vmem_limit_bytes=vmem_limit,
        ),
        cost_estimate=pl.CostEstimate(
            flops=flops, transcendentals=0, bytes_accessed=bytes_accessed),
    )(*args)

    out = out_padded[:M, :N] if (Mp, Np) != (M, N) else out_padded

    # tp world size 1: reduce_results all-reduce is identity.
    output_bias = params["bias"] if skip_bias_add else None
    return out, output_bias


def row_parallel_linear_with_lora(x, weight, bias=None, lora_A=None, lora_B=None, *,
                                  lora_rank=None, lora_alpha=None,
                                  skip_bias_add=False, compute_dtype=jnp.bfloat16,
                                  tm=512, tn=512, tk=1024):
    """One-shot convenience wrapper (prep + forward). For repeated calls, build
    params once with prepare_params() and reuse them."""
    params = prepare_params(weight, bias, lora_A, lora_B,
                            lora_rank=lora_rank, lora_alpha=lora_alpha,
                            compute_dtype=compute_dtype, tn=tn, tk=tk)
    return row_parallel_lora_forward(x, params, skip_bias_add=skip_bias_add, tm=tm)


if __name__ == "__main__":
    # Small shapes consistent with the module: batch=2, seq=8 -> M=16 tokens,
    # in_features K=384, out_features N=500 (not a tile multiple, exercises
    # padding), LoRA rank r=16, alpha=32.
    batch, seq = 2, 8
    M = batch * seq
    K, N, r = 384, 500, 16
    lora_rank, lora_alpha = r, 32
    scale = lora_alpha / lora_rank

    key = jax.random.PRNGKey(0)
    kx, kw, kb, ka, kbl = jax.random.split(key, 5)
    x = jax.random.normal(kx, (M, K), dtype=jnp.float32)
    weight = jax.random.normal(kw, (N, K), dtype=jnp.float32) * 0.02
    bias = jax.random.normal(kb, (N,), dtype=jnp.float32) * 0.1
    bound_a = (6.0 / K) ** 0.5
    bound_b = (6.0 / r) ** 0.5
    lora_A = jax.random.uniform(ka, (r, K), jnp.float32, minval=-bound_a, maxval=bound_a)
    lora_B = jax.random.uniform(kbl, (N, r), jnp.float32, minval=-bound_b, maxval=bound_b)

    # --- Test 1: f32 compute, small tiles -> multi-step K reduction + multiple
    # N tiles, fused bias, fused LoRA epilogue.
    out, out_bias = row_parallel_linear_with_lora(
        x, weight, bias, lora_A, lora_B,
        lora_rank=lora_rank, lora_alpha=lora_alpha,
        skip_bias_add=False, compute_dtype=jnp.float32, tn=128, tk=128)
    out = jax.block_until_ready(out)
    ref = x @ weight.T + scale * ((x @ lora_A.T) @ lora_B.T) + bias[None, :]
    assert out.shape == (M, N)
    assert out_bias is None
    assert jnp.allclose(out, ref, atol=1e-3, rtol=1e-3), "f32 mismatch vs reference"

    # --- Test 2: default bf16 MXU compute (f32 accumulate), prep-once pattern.
    params = prepare_params(weight, bias, lora_A, lora_B,
                            lora_rank=lora_rank, lora_alpha=lora_alpha,
                            compute_dtype=jnp.bfloat16)
    out_bf, _ = row_parallel_lora_forward(x, params, skip_bias_add=False)
    out_bf = jax.block_until_ready(out_bf)
    xb = x.astype(jnp.bfloat16).astype(jnp.float32)
    wb = weight.astype(jnp.bfloat16).astype(jnp.float32)
    ab = lora_A.astype(jnp.bfloat16).astype(jnp.float32)
    bb = lora_B.astype(jnp.bfloat16).astype(jnp.float32)
    xa_ref = (xb @ ab.T).astype(jnp.bfloat16).astype(jnp.float32)
    ref_bf = xb @ wb.T + scale * (xa_ref @ bb.T) + bias[None, :]
    assert jnp.allclose(out_bf, ref_bf, atol=2e-2, rtol=2e-2), "bf16 mismatch vs reference"

    # --- Test 3: skip_bias_add=True, LoRA disabled (base linear only), f32.
    out_nb, out_b = row_parallel_linear_with_lora(
        x, weight, bias, None, None,
        skip_bias_add=True, compute_dtype=jnp.float32, tn=128, tk=128)
    out_nb = jax.block_until_ready(out_nb)
    ref_nb = x @ weight.T
    assert out_b is not None and jnp.allclose(out_b, bias)
    assert jnp.allclose(out_nb, ref_nb, atol=1e-3, rtol=1e-3), "skip_bias_add mismatch"

    print("KERNEL_OK")
</pallas_src>

<mosaic_0001>
module attributes {stable_mosaic.version = 11 : i64} {
  func.func @kernel(%arg0: i32, %arg1: i32, %arg2: i32, %arg3: memref<16x128xf32, #tpu.memory_space<vmem>>, %arg4: memref<128x128xf32, #tpu.memory_space<vmem>>, %arg5: memref<16x16xf32, #tpu.memory_space<vmem>>, %arg6: memref<16x128xf32, #tpu.memory_space<vmem>>, %arg7: memref<1x128xf32, #tpu.memory_space<vmem>>, %arg8: memref<16x128xf32, #tpu.memory_space<vmem>>, %arg9: memref<16x128xf32, #tpu.memory_space<vmem>>) attributes {dimension_semantics = [#tpu.dimension_semantics<parallel>, #tpu.dimension_semantics<parallel>, #tpu.dimension_semantics<arbitrary>], iteration_bounds = array<i64: 1, 4, 3>, scalar_prefetch = 0 : i64, scratch_operands = 1 : i64, tpu.core_type = #tpu.core_type<tc>, window_params = [{transform_indices = @transform_0, window_bounds = array<i64: 16, 128>}, {transform_indices = @transform_1, window_bounds = array<i64: 128, 128>}, {transform_indices = @transform_2, window_bounds = array<i64: 16, 16>}, {transform_indices = @transform_3, window_bounds = array<i64: 16, 128>}, {transform_indices = @transform_4, window_bounds = array<i64: 1, 128>}, {transform_indices = @transform_5, window_bounds = array<i64: 16, 128>}]} {
    %c0_i32 = arith.constant 0 : i32
    %0 = arith.cmpi eq, %arg2, %c0_i32 : i32
    %1 = arith.extui %0 : i1 to i32
    %c0_i32_0 = arith.constant 0 : i32
    %2 = arith.cmpi ne, %1, %c0_i32_0 : i32
    scf.if %2 {
      %cst_9 = arith.constant 0.000000e+00 : f32
      %12 = vector.broadcast %cst_9 : f32 to vector<16x128xf32>
      %c0_10 = arith.constant 0 : index
      %c0_11 = arith.constant 0 : index
      %13 = vector.load %arg9[%c0_10, %c0_11] : memref<16x128xf32, #tpu.memory_space<vmem>>, vector<16x128xf32>
      tpu.vector_store %arg9[%c0_10, %c0_11], %12 {strides = array<i32>} : memref<16x128xf32, #tpu.memory_space<vmem>>, vector<16x128xf32>,
    } else {
    }
    %c0 = arith.constant 0 : index
    %c0_1 = arith.constant 0 : index
    %3 = vector.load %arg9[%c0, %c0_1] : memref<16x128xf32, #tpu.memory_space<vmem>>, vector<16x128xf32>
    %c0_2 = arith.constant 0 : index
    %c0_3 = arith.constant 0 : index
    %4 = vector.load %arg3[%c0_2, %c0_3] : memref<16x128xf32, #tpu.memory_space<vmem>>, vector<16x128xf32>
    %c0_4 = arith.constant 0 : index
    %c0_5 = arith.constant 0 : index
    %5 = vector.load %arg4[%c0_4, %c0_5] : memref<128x128xf32, #tpu.memory_space<vmem>>, vector<128x128xf32>
    %cst = arith.constant dense<0.000000e+00> : vector<16x128xf32>
    %6 = tpu.matmul %4, %5, %cst {dimension_numbers = #tpu.dot_dimension_numbers<[1], [0], [0], [1], [0, 0, 1, 1], [], []>} : vector<16x128xf32>, vector<128x128xf32>, vector<16x128xf32> -> vector<16x128xf32>
    %7 = arith.addf %3, %6 : vector<16x128xf32>
    %c0_6 = arith.constant 0 : index
    %c0_7 = arith.constant 0 : index
    %8 = vector.load %arg9[%c0_6, %c0_7] : memref<16x128xf32, #tpu.memory_space<vmem>>, vector<16x128xf32>
    tpu.vector_store %arg9[%c0_6, %c0_7], %7 {strides = array<i32>} : memref<16x128xf32, #tpu.memory_space<vmem>>, vector<16x128xf32>,
    %c2_i32 = arith.constant 2 : i32
    %9 = arith.cmpi eq, %arg2, %c2_i32 : i32
    %10 = arith.extui %9 : i1 to i32
    %c0_i32_8 = arith.constant 0 : i32
    %11 = arith.cmpi ne, %10, %c0_i32_8 : i32
    scf.if %11 {
      %c0_9 = arith.constant 0 : index
      %c0_10 = arith.constant 0 : index
      %12 = vector.load %arg9[%c0_9, %c0_10] : memref<16x128xf32, #tpu.memory_space<vmem>>, vector<16x128xf32>
      %c0_11 = arith.constant 0 : index
      %c0_12 = arith.constant 0 : index
      %13 = vector.load %arg5[%c0_11, %c0_12] : memref<16x16xf32, #tpu.memory_space<vmem>>, vector<16x16xf32>
      %c0_13 = arith.constant 0 : index
      %c0_14 = arith.constant 0 : index
      %14 = vector.load %arg6[%c0_13, %c0_14] : memref<16x128xf32, #tpu.memory_space<vmem>>, vector<16x128xf32>
      %cst_15 = arith.constant dense<0.000000e+00> : vector<16x128xf32>
      %15 = tpu.matmul %13, %14, %cst_15 {dimension_numbers = #tpu.dot_dimension_numbers<[1], [0], [0], [1], [0, 0, 1, 1], [], []>} : vector<16x16xf32>, vector<16x128xf32>, vector<16x128xf32> -> vector<16x128xf32>
      %cst_16 = arith.constant 2.000000e+00 : f32
      %16 = vector.broadcast %cst_16 : f32 to vector<16x128xf32>
      %17 = arith.mulf %15, %16 : vector<16x128xf32>
      %18 = arith.addf %12, %17 : vector<16x128xf32>
      %c0_17 = arith.constant 0 : index
      %c0_18 = arith.constant 0 : index
      %19 = vector.load %arg7[%c0_17, %c0_18] : memref<1x128xf32, #tpu.memory_space<vmem>>, vector<1x128xf32>
      %20 = vector.broadcast %19 : vector<1x128xf32> to vector<16x128xf32>
      %21 = arith.addf %18, %20 : vector<16x128xf32>
      %c0_19 = arith.constant 0 : index
      %c0_20 = arith.constant 0 : index
      %22 = vector.load %arg8[%c0_19, %c0_20] : memref<16x128xf32, #tpu.memory_space<vmem>>, vector<16x128xf32>
      tpu.vector_store %arg8[%c0_19, %c0_20], %21 {strides = array<i32>} : memref<16x128xf32, #tpu.memory_space<vmem>>, vector<16x128xf32>,
    } else {
    }
    return
  }
  func.func @transform_0(%arg0: i32, %arg1: i32, %arg2: i32) -> (i32, i32) {
    %c0_i32 = arith.constant 0 : i32
    return %arg0, %arg2 : i32, i32
  }
  func.func @transform_1(%arg0: i32, %arg1: i32, %arg2: i32) -> (i32, i32) {
    %c0_i32 = arith.constant 0 : i32
    return %arg2, %arg1 : i32, i32
  }
  func.func @transform_2(%arg0: i32, %arg1: i32, %arg2: i32) -> (i32, i32) {
    %c0_i32 = arith.constant 0 : i32
    %c0_i32_0 = arith.constant 0 : i32
    return %arg0, %c0_i32 : i32, i32
  }
  func.func @transform_3(%arg0: i32, %arg1: i32, %arg2: i32) -> (i32, i32) {
    %c0_i32 = arith.constant 0 : i32
    %c0_i32_0 = arith.constant 0 : i32
    return %c0_i32, %arg1 : i32, i32
  }
  func.func @transform_4(%arg0: i32, %arg1: i32, %arg2: i32) -> (i32, i32) {
    %c0_i32 = arith.constant 0 : i32
    %c0_i32_0 = arith.constant 0 : i32
    return %c0_i32, %arg1 : i32, i32
  }
  func.func @transform_5(%arg0: i32, %arg1: i32, %arg2: i32) -> (i32, i32) {
    %c0_i32 = arith.constant 0 : i32
    return %arg0, %arg1 : i32, i32
  }
}

</mosaic_0001>

<llo_original>
// kernel: tpu_custom_call.1
$region0: #{tpu_custom_call.1}
  #allocation0 [shape = 'u32[]', space=smem, size = 0x4, offset = 0x4, fixed_abs, tag = 'smem constant byte address 0x4 - core index']
  #allocation1 [shape = 'u32[144,128]{1,0:T(1,128)}', space=vmem, size = 0x12000, scoped, tag = 'internal scratch']
  #allocation2 [shape = 'f32[16,128]{1,0:T(8,128)}', space=vmem, size = 0x2000, scoped, tag = 'scratch operand']
  %s0 = inlined_call_operand.hbm [shape: f32[16,384], index: 0, kind: input, shape index: {}]
  %s1 = inlined_call_operand.hbm [shape: f32[384,512], index: 1, kind: input, shape index: {}]
  %s2 = inlined_call_operand.hbm [shape: f32[16,16], index: 2, kind: input, shape index: {}]
  %s3 = inlined_call_operand.hbm [shape: f32[16,512], index: 3, kind: input, shape index: {}]
  %s4 = inlined_call_operand.vmem [shape: f32[1,512], index: 4, kind: input, shape index: {}]
  %s5 = inlined_call_operand.hbm [shape: f32[16,512], index: 5, kind: output, shape index: {}]
  %s6 = sld [smem:[#allocation0]]
  $region77: #{tpu_custom_call.1} parent=0
    _
  %s8 = ssub.s32 1, %s6
  %s9 = scalar_select 0, %s8, %s6
  $region1: #{tpu_custom_call.1} parent=0
    #allocation3 [shape = 'u8[16384]{0}', space=vmem, size = 0x4000, scoped, tag = 'input window, operand 0']
    #allocation4 [shape = 's32[2]{0}', space=sflag, size = 0x8, scoped, tag = 'scoped memory for tpu_custom_call.1']
    #allocation5 [shape = 's32[2]{0}', space=sflag, size = 0x8, scoped, tag = 'scoped memory for tpu_custom_call.1']
    #allocation6 [shape = 'u8[131072]{0}', space=vmem, size = 0x20000, scoped, tag = 'input window, operand 1']
    #allocation7 [shape = 's32[2]{0}', space=sflag, size = 0x8, scoped, tag = 'scoped memory for tpu_custom_call.1']
    #allocation8 [shape = 'u8[8192]{0}', space=vmem, size = 0x2000, scoped, tag = 'input window, operand 2, single buffered']
    #allocation9 [shape = 'u8[16384]{0}', space=vmem, size = 0x4000, scoped, tag = 'input window, operand 3']
    #allocation10 [shape = 's32[2]{0}', space=sflag, size = 0x8, scoped, tag = 'scoped memory for tpu_custom_call.1']
    #allocation11 [shape = 'u8[16384]{0}', space=vmem, size = 0x4000, scoped, tag = 'output window, operand 0']
    %10 = vsyncpa [#allocation4], 0
    %s11 = scalar_lea.sflag [#allocation4], 1
    %12 = vsyncpa %s11, 0
    %13 = vsyncpa [#allocation7], 0
    %s14 = scalar_lea.sflag [#allocation7], 1
    %15 = vsyncpa %s14, 0
    %16 = vsyncpa [#allocation10], 0
    %s17 = scalar_lea.sflag [#allocation10], 1
    %18 = vsyncpa %s17, 0
    %19 = vsyncpa [#allocation5], 0
    %s20 = scalar_lea.sflag [#allocation5], 1
    %21 = vsyncpa %s20, 0
    loop: start=0, step=1, limit=14
    $region2: #{tpu_custom_call.1} parent=1 // loop_pre_header
      _
    $region3: #{tpu_custom_call.1} parent=1 // loop_header
      %s23 = sphi 0, %s27
      %p24 = scmp.ge.s32.totalorder %s23, 14
      %s30 = sphi 0, %s49
      %s31 = sphi 0, %s45
      %s32 = sphi 0, %s41
      %s33 = sphi 0, %s30
      %s34 = sphi 0, %s31
      %s35 = sphi 0, %s32
      %s36 = sphi 0, %s33
      %s37 = sphi 0, %s34
      %s38 = sphi 0, %s35
      %s54 = sphi 0, %s56
      %s57 = sphi 0, %s54
      %s58 = sphi 0, %s57
      %s74 = sphi 0, %s58
      %s82 = sphi 0, %s84
      %s85 = sphi 0, %s82
      %s86 = sphi 0, %s85
      %s102 = sphi 0, %s86
      %s108 = sphi 0, %s110
      %s111 = sphi 0, %s108
      %s112 = sphi 0, %s111
      %s128 = sphi 0, %s112
      %s134 = sphi 0, %s136
      %s137 = sphi 0, %s134
      %s138 = sphi 0, %s137
      %s154 = sphi 0, %s138
      %s160 = sphi 0, %s162
      %s163 = sphi 0, %s160
      %s164 = sphi 0, %s163
      %s180 = sphi 0, %s164
      %s188 = sphi 0, %s190
      %s191 = sphi 0, %s188
      %s192 = sphi 0, %s191
      %s208 = sphi 0, %s192
    $region4: #{tpu_custom_call.1} parent=1 // loop_header_branch
      %26 = sbr.rel (%p24) target = $region8
    $region5: #{tpu_custom_call.1} parent=1 // loop_body
      %s28 = ssub.s32 %s23, 1
      %s29 = ssub.s32 %s23, 2
      %s39 = sadd.s32 1, %s32
      %p40 = scmp.ge.s32.totalorder %s39, 3
      %s41 = scalar_select %p40, 0, %s39
      %s42 = sadd.s32 1, %s31
      %s43 = scalar_select %p40, %s42, %s31
      %p44 = scmp.ge.s32.totalorder %s43, 4
      %s45 = scalar_select %p44, 0, %s43
      %s46 = sadd.s32 1, %s30
      %s47 = scalar_select %p44, %s46, %s30
      %p48 = scmp.ge.s32.totalorder %s47, 1
      %s49 = scalar_select %p48, 0, %s47
      %s50 = ssub.s32 %s30, %s49
      %s51 = ssub.s32 %s32, %s41
      %s52 = sor.u32 %s50, %s51
      %p53 = scmp.eq.s32.totalorder %s52, 0
      %s55 = sadd.s32 %s54, 1
      %s56 = scalar_select %p53, %s54, %s55
      %p59 = pneg %p53
      %p60 = scmp.eq.s32.totalorder %s23, 11
      %p61 = por %p59, %p60
      %p62 = scmp.ne.s32.totalorder %s54, %s57
      %p63 = scmp.eq.s32.totalorder %s23, 0
      %p64 = por %p62, %p63
      %p65 = scmp.ne.s32.totalorder %s54, %s57
      %p66 = scmp.eq.s32.totalorder %s28, 11
      %p67 = por %p65, %p66
      %p68 = scmp.ne.s32.totalorder %s57, %s58
      %p69 = scmp.eq.s32.totalorder %s28, 0
      %p70 = por %p68, %p69
      %p71 = scmp.ne.s32.totalorder %s57, %s58
      %p72 = scmp.eq.s32.totalorder %s29, 11
      %p73 = por %p71, %p72
      %p75 = scmp.ne.s32.totalorder %s58, %s74
      %p76 = scmp.eq.s32.totalorder %s29, 0
      %p77 = por %p75, %p76
      %s78 = ssub.s32 %s32, %s41
      %s79 = ssub.s32 %s31, %s45
      %s80 = sor.u32 %s78, %s79
      %p81 = scmp.eq.s32.totalorder %s80, 0
      %s83 = sadd.s32 %s82, 1
      %s84 = scalar_select %p81, %s82, %s83
      %p87 = pneg %p81
      %p88 = scmp.eq.s32.totalorder %s23, 11
      %p89 = por %p87, %p88
      %p90 = scmp.ne.s32.totalorder %s82, %s85
      %p91 = scmp.eq.s32.totalorder %s23, 0
      %p92 = por %p90, %p91
      %p93 = scmp.ne.s32.totalorder %s82, %s85
      %p94 = scmp.eq.s32.totalorder %s28, 11
      %p95 = por %p93, %p94
      %p96 = scmp.ne.s32.totalorder %s85, %s86
      %p97 = scmp.eq.s32.totalorder %s28, 0
      %p98 = por %p96, %p97
      %p99 = scmp.ne.s32.totalorder %s85, %s86
      %p100 = scmp.eq.s32.totalorder %s29, 11
      %p101 = por %p99, %p100
      %p103 = scmp.ne.s32.totalorder %s86, %s102
      %p104 = scmp.eq.s32.totalorder %s29, 0
      %p105 = por %p103, %p104
      %s106 = ssub.s32 %s30, %s49
      %p107 = scmp.eq.s32.totalorder %s106, 0
      %s109 = sadd.s32 %s108, 1
      %s110 = scalar_select %p107, %s108, %s109
      %p113 = pneg %p107
      %p114 = scmp.eq.s32.totalorder %s23, 11
      %p115 = por %p113, %p114
      %p116 = scmp.ne.s32.totalorder %s108, %s111
      %p117 = scmp.eq.s32.totalorder %s23, 0
      %p118 = por %p116, %p117
      %p119 = scmp.ne.s32.totalorder %s108, %s111
      %p120 = scmp.eq.s32.totalorder %s28, 11
      %p121 = por %p119, %p120
      %p122 = scmp.ne.s32.totalorder %s111, %s112
      %p123 = scmp.eq.s32.totalorder %s28, 0
      %p124 = por %p122, %p123
      %p125 = scmp.ne.s32.totalorder %s111, %s112
      %p126 = scmp.eq.s32.totalorder %s29, 11
      %p127 = por %p125, %p126
      %p129 = scmp.ne.s32.totalorder %s112, %s128
      %p130 = scmp.eq.s32.totalorder %s29, 0
      %p131 = por %p129, %p130
      %s132 = ssub.s32 %s31, %s45
      %p133 = scmp.eq.s32.totalorder %s132, 0
      %s135 = sadd.s32 %s134, 1
      %s136 = scalar_select %p133, %s134, %s135
      %p139 = pneg %p133
      %p140 = scmp.eq.s32.totalorder %s23, 11
      %p141 = por %p139, %p140
      %p142 = scmp.ne.s32.totalorder %s134, %s137
      %p143 = scmp.eq.s32.totalorder %s23, 0
      %p144 = por %p142, %p143
      %p145 = scmp.ne.s32.totalorder %s134, %s137
      %p146 = scmp.eq.s32.totalorder %s28, 11
      %p147 = por %p145, %p146
      %p148 = scmp.ne.s32.totalorder %s137, %s138
      %p149 = scmp.eq.s32.totalorder %s28, 0
      %p150 = por %p148, %p149
      %p151 = scmp.ne.s32.totalorder %s137, %s138
      %p152 = scmp.eq.s32.totalorder %s29, 11
      %p153 = por %p151, %p152
      %p155 = scmp.ne.s32.totalorder %s138, %s154
      %p156 = scmp.eq.s32.totalorder %s29, 0
      %p157 = por %p155, %p156
      %s158 = ssub.s32 %s31, %s45
      %p159 = scmp.eq.s32.totalorder %s158, 0
      %s161 = sadd.s32 %s160, 1
      %s162 = scalar_select %p159, %s160, %s161
      %p165 = pneg %p159
      %p166 = scmp.eq.s32.totalorder %s23, 11
      %p167 = por %p165, %p166
      %p168 = scmp.ne.s32.totalorder %s160, %s163
      %p169 = scmp.eq.s32.totalorder %s23, 0
      %p170 = por %p168, %p169
      %p171 = scmp.ne.s32.totalorder %s160, %s163
      %p172 = scmp.eq.s32.totalorder %s28, 11
      %p173 = por %p171, %p172
      %p174 = scmp.ne.s32.totalorder %s163, %s164
      %p175 = scmp.eq.s32.totalorder %s28, 0
      %p176 = por %p174, %p175
      %p177 = scmp.ne.s32.totalorder %s163, %s164
      %p178 = scmp.eq.s32.totalorder %s29, 11
      %p179 = por %p177, %p178
      %p181 = scmp.ne.s32.totalorder %s164, %s180
      %p182 = scmp.eq.s32.totalorder %s29, 0
      %p183 = por %p181, %p182
      %s184 = ssub.s32 %s30, %s49
      %s185 = ssub.s32 %s31, %s45
      %s186 = sor.u32 %s184, %s185
      %p187 = scmp.eq.s32.totalorder %s186, 0
      %s189 = sadd.s32 %s188, 1
      %s190 = scalar_select %p187, %s188, %s189
      %p193 = pneg %p187
      %p194 = scmp.eq.s32.totalorder %s23, 11
      %p195 = por %p193, %p194
      %p196 = scmp.ne.s32.totalorder %s188, %s191
      %p197 = scmp.eq.s32.totalorder %s23, 0
      %p198 = por %p196, %p197
      %p199 = scmp.ne.s32.totalorder %s188, %s191
      %p200 = scmp.eq.s32.totalorder %s28, 11
      %p201 = por %p199, %p200
      %p202 = scmp.ne.s32.totalorder %s191, %s192
      %p203 = scmp.eq.s32.totalorder %s28, 0
      %p204 = por %p202, %p203
      %p205 = scmp.ne.s32.totalorder %s191, %s192
      %p206 = scmp.eq.s32.totalorder %s29, 11
      %p207 = por %p205, %p206
      %p209 = scmp.ne.s32.totalorder %s192, %s208
      %p210 = scmp.eq.s32.totalorder %s29, 0
      %p211 = por %p209, %p210
      %p212 = scmp.le.s32.totalorder 1, %s23
      %p213 = scmp.lt.s32.totalorder %s23, 13
      %p214 = pnand %p212, %p213
      %p215 = pneg %p214
      // Predicated region
      $region9: #{tpu_custom_call.1} parent=5 // pred_check
        _
      $region10: #{tpu_custom_call.1} parent=5 // pred_check_branch
        %217 = sbr.rel (%p214) target = $region12
      $region11: #{tpu_custom_call.1} parent=5 // pred_region
        %s218 = ssub.s32 %s23, 1
        // Predicated region
        $region13: #{tpu_custom_call.1} parent=11 // pred_check
          %p219 = pneg %p124
        $region14: #{tpu_custom_call.1} parent=11 // pred_check_branch
          %221 = sbr.rel (%p219) target = $region16
        $region15: #{tpu_custom_call.1} parent=11 // pred_region
          %s222 = smul.u32 2, %s33
          %s224 = ssub.s32 256, 256
          %225 = vsyncadd [#allocation7], %s224
          %s226 = smul.addr %s222, 128
          %s227 = scalar_lea.hbm %s2, %s226
          %s228 = sshll.u32 [#allocation8], 4
          %s229 = int_to_ptr.vmem [resolvable:$true] %s228
          %234 = dma.hbm_to_vmem [thread:$0]  %s227, 256, %s229, [#allocation7], 128, 128, 8
        $region16: #{tpu_custom_call.1} parent=11 // pred_fallthru
          _
      $region12: #{tpu_custom_call.1} parent=5 // pred_fallthru
        _
      %p235 = scmp.lt.s32.totalorder %s23, 12
      // Predicated region
      $region17: #{tpu_custom_call.1} parent=5 // pred_check
        %p236 = pneg %p235
      $region18: #{tpu_custom_call.1} parent=5 // pred_check_branch
        %238 = sbr.rel (%p236) target = $region20
      $region19: #{tpu_custom_call.1} parent=5 // pred_region
        // Predicated region
        $region21: #{tpu_custom_call.1} parent=19 // pred_check
          %p239 = pneg %p64
        $region22: #{tpu_custom_call.1} parent=19 // pred_check_branch
          %241 = sbr.rel (%p239) target = $region24
        $region23: #{tpu_custom_call.1} parent=19 // pred_region
          %s242 = sand.u32 %s54, 1
          %s243 = scalar_lea.sflag [#allocation4], %s242
          %s244 = sand.u32 %s54, 1
          %s245 = smul.addr %s244, 16
          %s246 = scalar_lea.vmem [#allocation3], %s245
          %s247 = smul.u32 2, %s30
          %s249 = ssub.s32 256, 256
          %250 = vsyncadd %s243, %s249
          %s251 = smul.addr %s247, 3
          %s252 = sadd.s32 %s32, %s251
          %s253 = smul.addr %s252, 128
          %s254 = scalar_lea.hbm %s0, %s253
          %s255 = sshll.u32 %s246, 4
          %s256 = int_to_ptr.vmem [resolvable:$true] %s255
          %261 = dma.hbm_to_vmem [thread:$0]  %s254, 256, %s256, %s243, 384, 128, 8
        $region24: #{tpu_custom_call.1} parent=19 // pred_fallthru
          _
        // Predicated region
        $region25: #{tpu_custom_call.1} parent=19 // pred_check
          %p262 = pneg %p92
        $region26: #{tpu_custom_call.1} parent=19 // pred_check_branch
          %264 = sbr.rel (%p262) target = $region28
        $region27: #{tpu_custom_call.1} parent=19 // pred_region
          %s265 = sand.u32 %s23, 1
          %s266 = scalar_lea.sflag [#allocation7], %s265
          %s267 = sand.u32 %s82, 1
          %s268 = smul.addr %s267, 128
          %s269 = scalar_lea.vmem [#allocation6], %s268
          %s270 = smul.u32 16, %s32
          %s272 = ssub.s32 2048, 2048
          %273 = vsyncadd %s266, %s272
          %s274 = smul.addr %s270, 4
          %s275 = sadd.s32 %s31, %s274
          %s276 = smul.addr %s275, 128
          %s277 = scalar_lea.hbm %s1, %s276
          %s278 = sshll.u32 %s269, 4
          %s279 = int_to_ptr.vmem [resolvable:$true] %s278
          %284 = dma.hbm_to_vmem [thread:$0]  %s277, 2048, %s279, %s266, 512, 128, 8
        $region28: #{tpu_custom_call.1} parent=19 // pred_fallthru
          _
        // Predicated region
        $region29: #{tpu_custom_call.1} parent=19 // pred_check
          %p285 = pneg %p144
        $region30: #{tpu_custom_call.1} parent=19 // pred_check_branch
          %287 = sbr.rel (%p285) target = $region32
        $region31: #{tpu_custom_call.1} parent=19 // pred_region
          %s288 = sand.u32 %s134, 1
          %s289 = scalar_lea.sflag [#allocation10], %s288
          %s290 = sand.u32 %s134, 1
          %s291 = smul.addr %s290, 16
          %s292 = scalar_lea.vmem [#allocation9], %s291
          %s294 = ssub.s32 256, 256
          %295 = vsyncadd %s289, %s294
          %s296 = smul.addr %s31, 128
          %s297 = scalar_lea.hbm %s3, %s296
          %s298 = sshll.u32 %s292, 4
          %s299 = int_to_ptr.vmem [resolvable:$true] %s298
          %304 = dma.hbm_to_vmem [thread:$0]  %s297, 256, %s299, %s289, 512, 128, 8
        $region32: #{tpu_custom_call.1} parent=19 // pred_fallthru
          _
        // Predicated region
        $region33: #{tpu_custom_call.1} parent=19 // pred_check
          %p305 = pneg %p170
        $region34: #{tpu_custom_call.1} parent=19 // pred_check_branch
          %307 = sbr.rel (%p305) target = $region36
        $region35: #{tpu_custom_call.1} parent=19 // pred_region
          %p308 = scmp.lt.s32.totalorder %s31, 3
          %s309 = scalar_select %p308, %s31, 3
          %s310 = scalar_lea.vmem %s4, %s309
        $region36: #{tpu_custom_call.1} parent=19 // pred_fallthru
          _
      $region20: #{tpu_custom_call.1} parent=5 // pred_fallthru
        _
      %p311 = scmp.le.s32.totalorder 1, %s23
      %p312 = scmp.lt.s32.totalorder %s23, 13
      %p313 = pnand %p311, %p312
      %p314 = pneg %p313
      // Predicated region
      $region37: #{tpu_custom_call.1} parent=5 // pred_check
        _
      $region38: #{tpu_custom_call.1} parent=5 // pred_check_branch
        %316 = sbr.rel (%p313) target = $region40
      $region39: #{tpu_custom_call.1} parent=5 // pred_region
        %s317 = ssub.s32 %s23, 1
        %s318 = sand.u32 %s57, 1
        %s319 = scalar_lea.sflag [#allocation4], %s318
        %s320 = sand.u32 %s57, 1
        %s321 = smul.addr %s320, 16
        %s322 = scalar_lea.vmem [#allocation3], %s321
        // Predicated region
        $region41: #{tpu_custom_call.1} parent=39 // pred_check
          %p323 = pneg %p70
        $region42: #{tpu_custom_call.1} parent=39 // pred_check_branch
          %325 = sbr.rel (%p323) target = $region44
        $region43: #{tpu_custom_call.1} parent=39 // pred_region
          %326 = dma.done %s319, 256
        $region44: #{tpu_custom_call.1} parent=39 // pred_fallthru
          _
        %s327 = sand.u32 %s28, 1
        %s328 = scalar_lea.sflag [#allocation7], %s327
        %s329 = sand.u32 %s85, 1
        %s330 = smul.addr %s329, 128
        %s331 = scalar_lea.vmem [#allocation6], %s330
        // Predicated region
        $region45: #{tpu_custom_call.1} parent=39 // pred_check
          %p332 = pneg %p98
        $region46: #{tpu_custom_call.1} parent=39 // pred_check_branch
          %334 = sbr.rel (%p332) target = $region48
        $region47: #{tpu_custom_call.1} parent=39 // pred_region
          %335 = dma.done %s328, 2048
        $region48: #{tpu_custom_call.1} parent=39 // pred_fallthru
          _
        // Predicated region
        $region49: #{tpu_custom_call.1} parent=39 // pred_check
          %p336 = pneg %p124
        $region50: #{tpu_custom_call.1} parent=39 // pred_check_branch
          %338 = sbr.rel (%p336) target = $region52
        $region51: #{tpu_custom_call.1} parent=39 // pred_region
          %339 = dma.done [#allocation7], 256
        $region52: #{tpu_custom_call.1} parent=39 // pred_fallthru
          _
        %s340 = sand.u32 %s137, 1
        %s341 = scalar_lea.sflag [#allocation10], %s340
        %s342 = sand.u32 %s137, 1
        %s343 = smul.addr %s342, 16
        %s344 = scalar_lea.vmem [#allocation9], %s343
        // Predicated region
        $region53: #{tpu_custom_call.1} parent=39 // pred_check
          %p345 = pneg %p150
        $region54: #{tpu_custom_call.1} parent=39 // pred_check_branch
          %347 = sbr.rel (%p345) target = $region56
        $region55: #{tpu_custom_call.1} parent=39 // pred_region
          %348 = dma.done %s341, 256
        $region56: #{tpu_custom_call.1} parent=39 // pred_fallthru
          _
        %s349 = sand.u32 %s57, 1
        %s350 = scalar_lea.sflag [#allocation4], %s349
        %s351 = sand.u32 %s57, 1
        %s352 = smul.addr %s351, 16
        %s353 = scalar_lea.vmem [#allocation3], %s352
        %p354 = pneg %p70
        %p355 = pneg %p67
        %s356 = sand.u32 %s28, 1
        %s357 = scalar_lea.sflag [#allocation7], %s356
        %s358 = sand.u32 %s85, 1
        %s359 = smul.addr %s358, 128
        %s360 = scalar_lea.vmem [#allocation6], %s359
        %p361 = pneg %p98
        %p362 = pneg %p95
        %p363 = pneg %p124
        %p364 = pneg %p121
        %s365 = sand.u32 %s137, 1
        %s366 = scalar_lea.sflag [#allocation10], %s365
        %s367 = sand.u32 %s137, 1
        %s368 = smul.addr %s367, 16
        %s369 = scalar_lea.vmem [#allocation9], %s368
        %p370 = pneg %p150
        %p371 = pneg %p147
        %p372 = scmp.lt.s32.totalorder %s34, 3
        %s373 = scalar_select %p372, %s34, 3
        %s374 = scalar_lea.vmem %s4, %s373
        %p375 = pneg %p176
        %p376 = pneg %p173
        %p377 = pneg %p204
        %p378 = pneg %p201
        %s379 = sand.u32 %s191, 1
        %s380 = scalar_lea.sflag [#allocation5], %s379
        %s381 = sand.u32 %s191, 1
        %s382 = smul.addr %s381, 16
        %s383 = scalar_lea.vmem [#allocation11], %s382
        %s384 = smul.u32 2, %s33
        %s385 = smul.u32 16, %s35
        %s386 = smul.u32 2, %s33
        %p387 = scmp.lt.s32.totalorder %s34, 3
        %s388 = scalar_select %p387, %s34, 3
        %s389 = scalar_lea.vmem %s4, %s388
        %s390 = smul.u32 2, %s33
        %p391 = scmp.eq.s32.totalorder %s35, 0
        // Predicated region
        $region57: #{tpu_custom_call.1} parent=39 // pred_check
          %p392 = pneg %p391
        $region58: #{tpu_custom_call.1} parent=39 // pred_check_branch
          %394 = sbr.rel (%p392) target = $region60
        $region59: #{tpu_custom_call.1} parent=39 // pred_region
          %395 = vst [vmem:[#allocation2] sm:$0xff] 0.0
          %396 = vst [vmem:[#allocation2 + $0x8] sm:$0xff] 0.0
        $region60: #{tpu_custom_call.1} parent=39 // pred_fallthru
          _
        %v397 = vld [vmem:[#allocation2] sm:$0xff]
        %v398 = vld [vmem:[#allocation2 + $0x8] sm:$0xff]
        %v399 = vld [vmem:[%s322] sm:$0xff]
        %v400 = vld [vmem:[%s322 + $0x8] sm:$0xff]
        %v401 = vld [vmem:[%s331] sm:$0xff]
        %v402 = vld [vmem:[%s331 + $0x8] sm:$0xff]
        %v403 = vld [vmem:[%s331 + $0x10] sm:$0xff]
        %v404 = vld [vmem:[%s331 + $0x18] sm:$0xff]
        %v405 = vld [vmem:[%s331 + $0x20] sm:$0xff]
        %v406 = vld [vmem:[%s331 + $0x28] sm:$0xff]
        %v407 = vld [vmem:[%s331 + $0x30] sm:$0xff]
        %v408 = vld [vmem:[%s331 + $0x38] sm:$0xff]
        %v409 = vld [vmem:[%s331 + $0x40] sm:$0xff]
        %v410 = vld [vmem:[%s331 + $0x48] sm:$0xff]
        %v411 = vld [vmem:[%s331 + $0x50] sm:$0xff]
        %v412 = vld [vmem:[%s331 + $0x58] sm:$0xff]
        %v413 = vld [vmem:[%s331 + $0x60] sm:$0xff]
        %v414 = vld [vmem:[%s331 + $0x68] sm:$0xff]
        %v415 = vld [vmem:[%s331 + $0x70] sm:$0xff]
        %v416 = vld [vmem:[%s331 + $0x78] sm:$0xff]
        %417 = vmatprep.subr.mxu0 0.0
        %418 = vmatpush1.msra.mxu0 %v401
        %419 = vmatprep.subr.mxu0 0.0
        %420 = vmatpush1.msra.mxu0 %v402
        %421 = vmatprep.subr.mxu0 0.0
        %422 = vmatpush1.msra.mxu0 %v403
        %423 = vmatprep.subr.mxu0 0.0
        %424 = vmatpush1.msra.mxu0 %v404
        %425 = vmatprep.subr.mxu0 0.0
        %426 = vmatpush1.msra.mxu0 %v405
        %427 = vmatprep.subr.mxu0 0.0
        %428 = vmatpush1.msra.mxu0 %v406
        %429 = vmatprep.subr.mxu0 0.0
        %430 = vmatpush1.msra.mxu0 %v407
        %431 = vmatprep.subr.mxu0 0.0
        %432 = vmatpush1.msra.mxu0 %v408
        %433 = vmatprep.subr.mxu0 0.0
        %434 = vmatpush1.msra.mxu0 %v409
        %435 = vmatprep.subr.mxu0 0.0
        %436 = vmatpush1.msra.mxu0 %v410
        %437 = vmatprep.subr.mxu0 0.0
        %438 = vmatpush1.msra.mxu0 %v411
        %439 = vmatprep.subr.mxu0 0.0
        %440 = vmatpush1.msra.mxu0 %v412
        %441 = vmatprep.subr.mxu0 0.0
        %442 = vmatpush1.msra.mxu0 %v413
        %443 = vmatprep.subr.mxu0 0.0
        %444 = vmatpush1.msra.mxu0 %v414
        %445 = vmatprep.subr.mxu0 0.0
        %446 = vmatpush1.msra.mxu0 %v415
        %447 = vmatprep.subr.mxu0 0.0
        %448 = vmatpush1.msra.mxu0 %v416
        %449 = vmatprep.subr.mxu0 0.0
        %450 = vmatpush1.msra.mxu0 0.0
        %451 = vmatprep.subr.mxu0 0.0
        %452 = vmatpush1.msra.mxu0 0.0
        %453 = vmatprep.subr.mxu0 0.0
        %454 = vmatpush1.msra.mxu0 0.0
        %455 = vmatprep.subr.mxu0 0.0
        %456 = vmatpush1.msra.mxu0 0.0
        %457 = vmatprep.subr.mxu0 0.0
        %458 = vmatpush1.msra.mxu0 0.0
        %459 = vmatprep.subr.mxu0 0.0
        %460 = vmatpush1.msra.mxu0 0.0
        %461 = vmatprep.subr.mxu0 0.0
        %462 = vmatpush1.msra.mxu0 0.0
        %463 = vmatprep.subr.mxu0 0.0
        %464 = vmatpush1.msra.mxu0 0.0
        %465 = vmatprep.subr.mxu0 0.0
        %466 = vmatpush1.msra.mxu0 0.0
        %467 = vmatprep.subr.mxu0 0.0
        %468 = vmatpush1.msra.mxu0 0.0
        %469 = vmatprep.subr.mxu0 0.0
        %470 = vmatpush1.msra.mxu0 0.0
        %471 = vmatprep.subr.mxu0 0.0
        %472 = vmatpush1.msra.mxu0 0.0
        %473 = vmatprep.subr.mxu0 0.0
        %474 = vmatpush1.msra.mxu0 0.0
        %475 = vmatprep.subr.mxu0 0.0
        %476 = vmatpush1.msra.mxu0 0.0
        %477 = vmatprep.subr.mxu0 0.0
        %478 = vmatpush1.msra.mxu0 0.0
        %479 = vmatprep.subr.mxu0 0.0
        %480 = vmatpush1.msra.mxu0 0.0
        %481 = vmatprep.mubr.f32.mxu0 0.0
        %482 = vmatmul.mubr.f32.gmra.mrb[0].mxu0 %v399
        %v483 = vpop.f32.mrb[0].mxu0
        %v484 = vadd.f32 0.0, %v483
        %v485 = vpop.f32.mrb[0].mxu0
        %486 = vmatprep.mubr.f32.mxu0 0.0
        %487 = vmatmul.mubr.f32.gmra.mrb[0].mxu0 %v400
        %v488 = vpop.f32.mrb[0].mxu0
        %v489 = vadd.f32 0.0, %v488
        %v490 = vpop.f32.mrb[0].mxu0
        %491 = vdwg.mxu0
        %v492 = vadd.f32 %v397, %v484
        %v493 = vadd.f32 %v398, %v489
        %494 = vst [vmem:[#allocation2] sm:$0xff] %v492
        %495 = vst [vmem:[#allocation2 + $0x8] sm:$0xff] %v493
        %p496 = scmp.eq.s32.totalorder %s35, 2
        // Predicated region
        $region61: #{tpu_custom_call.1} parent=39 // pred_check
          %p497 = pneg %p496
        $region62: #{tpu_custom_call.1} parent=39 // pred_check_branch
          %499 = sbr.rel (%p497) target = $region64
        $region63: #{tpu_custom_call.1} parent=39 // pred_region
          %v500 = vld [vmem:[#allocation2] sm:$0xff]
          %v501 = vld [vmem:[#allocation2 + $0x8] sm:$0xff]
          %v502 = vld [vmem:[#allocation8] sm:$0xff]
          %v503 = vld [vmem:[#allocation8 + $0x8] sm:$0xff]
          %v504 = vld [vmem:[%s344] sm:$0xff]
          %v505 = vld [vmem:[%s344 + $0x8] sm:$0xff]
          %vm506 = vcmask 130048
          %v508 = vsel %vm506, %v502, 0
          %v511 = vsel %vm506, %v503, 0
          %513 = vmatprep.subr.mxu0 0.0
          %514 = vmatpush1.msra.mxu0 %v504
          %515 = vmatprep.subr.mxu0 0.0
          %516 = vmatpush1.msra.mxu0 %v505
          %517 = vmatprep.subr.mxu0 0.0
          %518 = vmatpush1.msra.mxu0 0.0
          %519 = vmatprep.subr.mxu0 0.0
          %520 = vmatpush1.msra.mxu0 0.0
          %521 = vmatprep.subr.mxu0 0.0
          %522 = vmatpush1.msra.mxu0 0.0
          %523 = vmatprep.subr.mxu0 0.0
          %524 = vmatpush1.msra.mxu0 0.0
          %525 = vmatprep.subr.mxu0 0.0
          %526 = vmatpush1.msra.mxu0 0.0
          %527 = vmatprep.subr.mxu0 0.0
          %528 = vmatpush1.msra.mxu0 0.0
          %529 = vmatprep.subr.mxu0 0.0
          %530 = vmatpush1.msra.mxu0 0.0
          %531 = vmatprep.subr.mxu0 0.0
          %532 = vmatpush1.msra.mxu0 0.0
          %533 = vmatprep.subr.mxu0 0.0
          %534 = vmatpush1.msra.mxu0 0.0
          %535 = vmatprep.subr.mxu0 0.0
          %536 = vmatpush1.msra.mxu0 0.0
          %537 = vmatprep.subr.mxu0 0.0
          %538 = vmatpush1.msra.mxu0 0.0
          %539 = vmatprep.subr.mxu0 0.0
          %540 = vmatpush1.msra.mxu0 0.0
          %541 = vmatprep.subr.mxu0 0.0
          %542 = vmatpush1.msra.mxu0 0.0
          %543 = vmatprep.subr.mxu0 0.0
          %544 = vmatpush1.msra.mxu0 0.0
          %545 = vmatprep.subr.mxu0 0.0
          %546 = vmatpush1.msra.mxu0 0.0
          %547 = vmatprep.subr.mxu0 0.0
          %548 = vmatpush1.msra.mxu0 0.0
          %549 = vmatprep.subr.mxu0 0.0
          %550 = vmatpush1.msra.mxu0 0.0
          %551 = vmatprep.subr.mxu0 0.0
          %552 = vmatpush1.msra.mxu0 0.0
          %553 = vmatprep.subr.mxu0 0.0
          %554 = vmatpush1.msra.mxu0 0.0
          %555 = vmatprep.subr.mxu0 0.0
          %556 = vmatpush1.msra.mxu0 0.0
          %557 = vmatprep.subr.mxu0 0.0
          %558 = vmatpush1.msra.mxu0 0.0
          %559 = vmatprep.subr.mxu0 0.0
          %560 = vmatpush1.msra.mxu0 0.0
          %561 = vmatprep.subr.mxu0 0.0
          %562 = vmatpush1.msra.mxu0 0.0
          %563 = vmatprep.subr.mxu0 0.0
          %564 = vmatpush1.msra.mxu0 0.0
          %565 = vmatprep.subr.mxu0 0.0
          %566 = vmatpush1.msra.mxu0 0.0
          %567 = vmatprep.subr.mxu0 0.0
          %568 = vmatpush1.msra.mxu0 0.0
          %569 = vmatprep.subr.mxu0 0.0
          %570 = vmatpush1.msra.mxu0 0.0
          %571 = vmatprep.subr.mxu0 0.0
          %572 = vmatpush1.msra.mxu0 0.0
          %573 = vmatprep.subr.mxu0 0.0
          %574 = vmatpush1.msra.mxu0 0.0
          %575 = vmatprep.subr.mxu0 0.0
          %576 = vmatpush1.msra.mxu0 0.0
          %577 = vmatprep.mubr.f32.mxu0 0.0
          %578 = vmatmul.mubr.f32.gmra.mrb[0].mxu0 %v508
          %v579 = vpop.f32.mrb[0].mxu0
          %v580 = vadd.f32 0.0, %v579
          %v581 = vpop.f32.mrb[0].mxu0
          %582 = vmatprep.mubr.f32.mxu0 0.0
          %583 = vmatmul.mubr.f32.gmra.mrb[0].mxu0 %v511
          %v584 = vpop.f32.mrb[0].mxu0
          %v585 = vadd.f32 0.0, %v584
          %v586 = vpop.f32.mrb[0].mxu0
          %587 = vdwg.mxu0
          %v588 = vmul.f32 %v580, 2.0
          %v589 = vmul.f32 %v585, 2.0
          %v590 = vadd.f32 %v500, %v588
          %v591 = vadd.f32 %v501, %v589
          %v592 = vld [vmem:[%s389] sm:$0x1]
          %v594 = vlaneseq
          %v595 = vshrl.u32 %v594, 7
          %v596 = vsub.s32 0, %v595
          %v597 = vrot.slane %v592, %v596
          %v599 = vadd.f32 %v590, %v597
          %v600 = vadd.f32 %v591, %v597
          %601 = vst [vmem:[%s383] sm:$0xff] %v599
          %602 = vst [vmem:[%s383 + $0x8] sm:$0xff] %v600
        $region64: #{tpu_custom_call.1} parent=39 // pred_fallthru
          _
        %s603 = sand.u32 %s191, 1
        %s604 = scalar_lea.sflag [#allocation5], %s603
        %s605 = sand.u32 %s191, 1
        %s606 = smul.addr %s605, 16
        %s607 = scalar_lea.vmem [#allocation11], %s606
        // Predicated region
        $region65: #{tpu_custom_call.1} parent=39 // pred_check
          %p608 = pneg %p201
        $region66: #{tpu_custom_call.1} parent=39 // pred_check_branch
          %610 = sbr.rel (%p608) target = $region68
        $region67: #{tpu_custom_call.1} parent=39 // pred_region
          %s611 = smul.u32 2, %s33
          %s613 = ssub.s32 256, 256
          %614 = vsyncadd %s604, %s613
          %s615 = smul.addr %s611, 4
          %s616 = sadd.s32 %s34, %s615
          %s617 = smul.addr %s616, 128
          %s618 = scalar_lea.hbm %s5, %s617
          %s619 = sshll.u32 %s607, 4
          %s620 = int_to_ptr.vmem [resolvable:$true] %s619
          %625 = dma.vmem_to_hbm [thread:$0]  %s620, 256, %s618, %s604, 128, 512, 8
        $region68: #{tpu_custom_call.1} parent=39 // pred_fallthru
          _
      $region40: #{tpu_custom_call.1} parent=5 // pred_fallthru
        _
      %p626 = scmp.le.s32.totalorder 2, %s23
      // Predicated region
      $region69: #{tpu_custom_call.1} parent=5 // pred_check
        %p627 = pneg %p626
      $region70: #{tpu_custom_call.1} parent=5 // pred_check_branch
        %629 = sbr.rel (%p627) target = $region72
      $region71: #{tpu_custom_call.1} parent=5 // pred_region
        %s630 = ssub.s32 %s23, 2
        // Predicated region
        $region73: #{tpu_custom_call.1} parent=71 // pred_check
          %p631 = pneg %p207
        $region74: #{tpu_custom_call.1} parent=71 // pred_check_branch
          %633 = sbr.rel (%p631) target = $region76
        $region75: #{tpu_custom_call.1} parent=71 // pred_region
          %s634 = sand.u32 %s192, 1
          %s635 = scalar_lea.sflag [#allocation5], %s634
          %s636 = sand.u32 %s192, 1
          %s637 = smul.addr %s636, 16
          %s638 = scalar_lea.vmem [#allocation11], %s637
          %639 = dma.done %s635, 256
        $region76: #{tpu_custom_call.1} parent=71 // pred_fallthru
          _
      $region72: #{tpu_custom_call.1} parent=5 // pred_fallthru
        _
    $region6: #{tpu_custom_call.1} parent=1 // loop_footer
      %s27 = sadd.s32 1, %s23
    $region7: #{tpu_custom_call.1} parent=1 // loop_footer_branch
      %22 = sbr.rel target = $region3
    $region8: #{tpu_custom_call.1} parent=1 // loop_exit
      _
    %640 = vsyncpa [#allocation4], 1
    %s641 = scalar_lea.sflag [#allocation4], 1
    %642 = vsyncpa %s641, 1
    %643 = vsyncpa [#allocation7], 1
    %s644 = scalar_lea.sflag [#allocation7], 1
    %645 = vsyncpa %s644, 1
    %646 = vsyncpa [#allocation10], 1
    %s647 = scalar_lea.sflag [#allocation10], 1
    %648 = vsyncpa %s647, 1
    %649 = vsyncpa [#allocation5], 1
    %s650 = scalar_lea.sflag [#allocation5], 1
    %651 = vsyncpa %s650, 1

</llo_original>
